<compile_context>
chip_gen: v6e
topology: v6e:2x2x1
jax: 0.10.0
libtpu: 0.0.40
codegen_flags: <defaults>
</compile_context>

<pallas_src>
import functools

import jax
import jax.numpy as jnp
from jax import lax
from jax.experimental import pallas as pl
from jax.experimental.pallas import tpu as pltpu

BN_EPS = 1e-5  # PyTorch BatchNorm1d default


def _critic_kernel(batch_n,
                   state_ref, action_ref,
                   w1_ref, vec1_ref,          # vec1 rows: [b1, gamma, beta]   (3, H1) f32
                   w2a_ref, w2b_ref, vec2_ref,  # vec2 rows: [b2, w3^T, b3*1]  (3, H2) f32
                   out_ref,                   # (TB, H2) lane-dense; col 0 is the answer
                   stats_ref):                # VMEM scratch (2, H1): [sum, sumsq] of h1_lin
    p = pl.program_id(0)   # 0 = BN-stats pass, 1 = compute pass
    i = pl.program_id(1)   # batch tile index

    # ---- Linear(state_size -> H1) on the MXU: bf16 operands, f32 accumulation ----
    x = state_ref[...].astype(jnp.bfloat16)
    h1_lin = (jnp.dot(x, w1_ref[...], preferred_element_type=jnp.float32)
              + vec1_ref[0:1, :])                      # + b1   (f32)

    @pl.when(jnp.logical_and(p == 0, i == 0))
    def _init_stats():
        stats_ref[...] = jnp.zeros_like(stats_ref)

    @pl.when(p == 0)
    def _accumulate_stats():
        stats_ref[0:1, :] = stats_ref[0:1, :] + jnp.sum(h1_lin, axis=0, keepdims=True)
        stats_ref[1:2, :] = stats_ref[1:2, :] + jnp.sum(h1_lin * h1_lin, axis=0,
                                                        keepdims=True)

    @pl.when(p == 1)
    def _compute():
        # ---- BatchNorm1d (training mode: biased batch variance) + ReLU, in f32 ----
        inv_n = 1.0 / batch_n
        mean = stats_ref[0:1, :] * inv_n
        var = stats_ref[1:2, :] * inv_n - mean * mean
        h1 = (h1_lin - mean) * lax.rsqrt(var + BN_EPS)
        h1 = h1 * vec1_ref[1:2, :] + vec1_ref[2:3, :]   # gamma, beta
        h1 = jnp.maximum(h1, 0.0)

        # ---- cat((h1, action)) @ W2 + b2, computed as split matmuls (exact) ----
        a = action_ref[...].astype(jnp.bfloat16)
        h2 = (jnp.dot(h1.astype(jnp.bfloat16), w2a_ref[...],
                      preferred_element_type=jnp.float32)
              + jnp.dot(a, w2b_ref[...], preferred_element_type=jnp.float32)
              + vec2_ref[0:1, :])                       # + b2
        h2 = jnp.maximum(h2, 0.0)

        # ---- Linear(H2 -> 1) on the VPU/XLU: mul + lane reduce (no N=1 MXU pass) ----
        val = jnp.sum(h2 * vec2_ref[1:2, :], axis=1, keepdims=True)   # (TB, 1)
        # Lane-dense store: broadcast across 128 lanes; wrapper slices column 0.
        out_ref[...] = val + vec2_ref[2:3, :]                          # + b3, (TB, H2)


def _choose_batch_tile(batch):
    if batch % 8 != 0:
        return batch                       # single full-batch tile (block == full dim)
    for tb in (512, 256, 128, 64, 32, 16, 8):
        if batch % tb == 0:
            return tb
    return batch


def make_params(key, state_size, action_size, hidden=(256, 128)):
    """PyTorch-Linear-style init U(-1/sqrt(fan_in), 1/sqrt(fan_in)); packed for the kernel."""
    h1, h2 = hidden
    keys = jax.random.split(key, 6)

    def lin(kw, kb, fan_in, fan_out):
        bound = 1.0 / jnp.sqrt(jnp.float32(fan_in))
        w = jax.random.uniform(kw, (fan_in, fan_out), jnp.float32, -bound, bound)
        b = jax.random.uniform(kb, (1, fan_out), jnp.float32, -bound, bound)
        return w, b

    w1, b1 = lin(keys[0], keys[1], state_size, h1)
    gamma = jnp.ones((1, h1), jnp.float32)             # BatchNorm1d weight init
    beta = jnp.zeros((1, h1), jnp.float32)             # BatchNorm1d bias init
    w2, b2 = lin(keys[2], keys[3], h1 + action_size, h2)
    w2a, w2b = w2[:h1], w2[h1:]                        # concat-free split
    w3, b3 = lin(keys[4], keys[5], h2, 1)

    vec1 = jnp.concatenate([b1, gamma, beta], axis=0)                       # (3, H1) f32
    vec2 = jnp.concatenate([b2, w3.T, jnp.full((1, h2), b3[0, 0])], axis=0)  # (3, H2) f32

    # Weights as bf16 MXU operands; biases / BN params stay f32.
    return (w1.astype(jnp.bfloat16), vec1,
            w2a.astype(jnp.bfloat16), w2b.astype(jnp.bfloat16), vec2)


@jax.jit
def critic_policy_forward(state, action, params):
    w1, vec1, w2a, w2b, vec2 = params
    B, S = state.shape
    A = action.shape[1]
    H1 = w1.shape[1]
    H2 = w2a.shape[1]

    TB = _choose_batch_tile(B)
    nbt = B // TB
    assert TB * nbt == B

    kernel = functools.partial(_critic_kernel, float(B))

    out_padded = pl.pallas_call(
        kernel,
        out_shape=jax.ShapeDtypeStruct((B, H2), jnp.float32),
        grid_spec=pltpu.PrefetchScalarGridSpec(
            num_scalar_prefetch=0,
            grid=(2, nbt),                          # (pass, batch tile)
            in_specs=[
                pl.BlockSpec((TB, S), lambda p, i: (i, 0)),   # state tile
                pl.BlockSpec((TB, A), lambda p, i: (i, 0)),   # action tile
                pl.BlockSpec((S, H1), lambda p, i: (0, 0)),   # w1  (VMEM-resident)
                pl.BlockSpec((3, H1), lambda p, i: (0, 0)),   # [b1, gamma, beta]
                pl.BlockSpec((H1, H2), lambda p, i: (0, 0)),  # w2a (VMEM-resident)
                pl.BlockSpec((A, H2), lambda p, i: (0, 0)),   # w2b (VMEM-resident)
                pl.BlockSpec((3, H2), lambda p, i: (0, 0)),   # [b2, w3^T, b3]
            ],
            out_specs=pl.BlockSpec((TB, H2), lambda p, i: (i, 0)),
            scratch_shapes=[pltpu.VMEM((2, H1), jnp.float32)],   # BN sum / sumsq
        ),
        compiler_params=pltpu.CompilerParams(
            dimension_semantics=("arbitrary", "arbitrary")),
    )(state, action, w1, vec1, w2a, w2b, vec2)

    return out_padded[:, :1]   # lane-dense kernel output; take column 0


def reference_forward(state, action, params):
    """Pure-JAX reference mirroring the kernel's math (training-mode BN, bf16 matmuls)."""
    w1, vec1, w2a, w2b, vec2 = params
    b1, gamma, beta = vec1[0:1], vec1[1:2], vec1[2:3]
    b2, w3_row, b3_row = vec2[0:1], vec2[1:2], vec2[2:3]
    n = state.shape[0]

    h1 = jnp.dot(state.astype(jnp.bfloat16), w1, preferred_element_type=jnp.float32) + b1
    mean = jnp.sum(h1, axis=0, keepdims=True) / n
    var = jnp.sum(h1 * h1, axis=0, keepdims=True) / n - mean * mean
    h1 = (h1 - mean) * lax.rsqrt(var + BN_EPS)
    h1 = jnp.maximum(h1 * gamma + beta, 0.0)

    h2 = (jnp.dot(h1.astype(jnp.bfloat16), w2a, preferred_element_type=jnp.float32)
          + jnp.dot(action.astype(jnp.bfloat16), w2b, preferred_element_type=jnp.float32)
          + b2)
    h2 = jnp.maximum(h2, 0.0)
    return jnp.sum(h2 * w3_row, axis=1, keepdims=True) + b3_row[:, :1]


if __name__ == "__main__":
    B, STATE_SIZE, ACTION_SIZE = 8, 32, 8
    HIDDEN = (256, 128)

    root = jax.random.PRNGKey(0)
    k_state, k_action, k_params = jax.random.split(root, 3)
    state = jax.random.normal(k_state, (B, STATE_SIZE), jnp.float32)
    action = jax.random.normal(k_action, (B, ACTION_SIZE), jnp.float32)
    params = make_params(k_params, STATE_SIZE, ACTION_SIZE, HIDDEN)

    out = critic_policy_forward(state, action, params)
    jax.block_until_ready(out)

    ref = reference_forward(state, action, params)
    assert out.shape == (B, 1), out.shape
    assert jnp.allclose(out, ref, atol=5e-3, rtol=5e-3), (out, ref)
    print("KERNEL_OK")
</pallas_src>

<mosaic_0001>
module attributes {stable_mosaic.version = 11 : i64} {
  func.func @_critic_kernel(%arg0: i32, %arg1: i32, %arg2: memref<8x32xf32, #tpu.memory_space<vmem>>, %arg3: memref<8x8xf32, #tpu.memory_space<vmem>>, %arg4: memref<32x256xbf16, #tpu.memory_space<vmem>>, %arg5: memref<3x256xf32, #tpu.memory_space<vmem>>, %arg6: memref<256x128xbf16, #tpu.memory_space<vmem>>, %arg7: memref<8x128xbf16, #tpu.memory_space<vmem>>, %arg8: memref<3x128xf32, #tpu.memory_space<vmem>>, %arg9: memref<8x128xf32, #tpu.memory_space<vmem>>, %arg10: memref<2x256xf32, #tpu.memory_space<vmem>>) attributes {dimension_semantics = [#tpu.dimension_semantics<arbitrary>, #tpu.dimension_semantics<arbitrary>], iteration_bounds = array<i64: 2, 1>, scalar_prefetch = 0 : i64, scratch_operands = 1 : i64, tpu.core_type = #tpu.core_type<tc>, window_params = [{transform_indices = @transform_0, window_bounds = array<i64: 8, 32>}, {transform_indices = @transform_1, window_bounds = array<i64: 8, 8>}, {pipeline_mode = #tpu.pipeline_mode<synchronous>, transform_indices = @transform_2, window_bounds = array<i64: 32, 256>}, {pipeline_mode = #tpu.pipeline_mode<synchronous>, transform_indices = @transform_3, window_bounds = array<i64: 3, 256>}, {pipeline_mode = #tpu.pipeline_mode<synchronous>, transform_indices = @transform_4, window_bounds = array<i64: 256, 128>}, {pipeline_mode = #tpu.pipeline_mode<synchronous>, transform_indices = @transform_5, window_bounds = array<i64: 8, 128>}, {pipeline_mode = #tpu.pipeline_mode<synchronous>, transform_indices = @transform_6, window_bounds = array<i64: 3, 128>}, {transform_indices = @transform_7, window_bounds = array<i64: 8, 128>}]} {
    %c0 = arith.constant 0 : index
    %c0_0 = arith.constant 0 : index
    %0 = vector.load %arg2[%c0, %c0_0] : memref<8x32xf32, #tpu.memory_space<vmem>>, vector<8x32xf32>
    %1 = arith.truncf %0 : vector<8x32xf32> to vector<8x32xbf16>
    %c0_1 = arith.constant 0 : index
    %c0_2 = arith.constant 0 : index
    %2 = vector.load %arg4[%c0_1, %c0_2] : memref<32x256xbf16, #tpu.memory_space<vmem>>, vector<32x256xbf16>
    %cst = arith.constant dense<0.000000e+00> : vector<8x256xf32>
    %3 = tpu.matmul %1, %2, %cst {dimension_numbers = #tpu.dot_dimension_numbers<[1], [0], [0], [1], [0, 0, 1, 1], [], []>} : vector<8x32xbf16>, vector<32x256xbf16>, vector<8x256xf32> -> vector<8x256xf32>
    %c0_3 = arith.constant 0 : index
    %c0_4 = arith.constant 0 : index
    %4 = vector.load %arg5[%c0_3, %c0_4] : memref<3x256xf32, #tpu.memory_space<vmem>>, vector<1x256xf32>
    %5 = vector.broadcast %4 : vector<1x256xf32> to vector<8x256xf32>
    %6 = arith.addf %3, %5 : vector<8x256xf32>
    %c0_i32 = arith.constant 0 : i32
    %7 = arith.cmpi eq, %arg0, %c0_i32 : i32
    %c0_i32_5 = arith.constant 0 : i32
    %8 = arith.cmpi eq, %arg1, %c0_i32_5 : i32
    %9 = arith.andi %7, %8 : i1
    %10 = arith.extui %9 : i1 to i32
    %c0_i32_6 = arith.constant 0 : i32
    %11 = arith.cmpi ne, %10, %c0_i32_6 : i32
    scf.if %11 {
      %cst_10 = arith.constant 0.000000e+00 : f32
      %18 = vector.broadcast %cst_10 : f32 to vector<2x256xf32>
      %c0_11 = arith.constant 0 : index
      %c0_12 = arith.constant 0 : index
      %19 = vector.load %arg10[%c0_11, %c0_12] : memref<2x256xf32, #tpu.memory_space<vmem>>, vector<2x256xf32>
      tpu.vector_store %arg10[%c0_11, %c0_12], %18 {strides = array<i32>} : memref<2x256xf32, #tpu.memory_space<vmem>>, vector<2x256xf32>,
    } else {
    }
    %c0_i32_7 = arith.constant 0 : i32
    %12 = arith.cmpi eq, %arg0, %c0_i32_7 : i32
    %13 = arith.extui %12 : i1 to i32
    %c0_i32_8 = arith.constant 0 : i32
    %14 = arith.cmpi ne, %13, %c0_i32_8 : i32
    scf.if %14 {
      %c0_10 = arith.constant 0 : index
      %c0_11 = arith.constant 0 : index
      %18 = vector.load %arg10[%c0_10, %c0_11] : memref<2x256xf32, #tpu.memory_space<vmem>>, vector<1x256xf32>
      %cst_12 = arith.constant dense<0.000000e+00> : vector<256xf32>
      %19 = vector.multi_reduction <add>, %6, %cst_12 [0] : vector<8x256xf32> to vector<256xf32>
      %20 = vector.shape_cast %19 : vector<256xf32> to vector<1x256xf32>
      %21 = arith.addf %18, %20 : vector<1x256xf32>
      %c0_13 = arith.constant 0 : index
      %c0_14 = arith.constant 0 : index
      %22 = vector.load %arg10[%c0_13, %c0_14] : memref<2x256xf32, #tpu.memory_space<vmem>>, vector<1x256xf32>
      tpu.vector_store %arg10[%c0_13, %c0_14], %21 {strides = array<i32>} : memref<2x256xf32, #tpu.memory_space<vmem>>, vector<1x256xf32>,
      %c1 = arith.constant 1 : index
      %c0_15 = arith.constant 0 : index
      %23 = vector.load %arg10[%c1, %c0_15] : memref<2x256xf32, #tpu.memory_space<vmem>>, vector<1x256xf32>
      %24 = arith.mulf %6, %6 : vector<8x256xf32>
      %cst_16 = arith.constant dense<0.000000e+00> : vector<256xf32>
      %25 = vector.multi_reduction <add>, %24, %cst_16 [0] : vector<8x256xf32> to vector<256xf32>
      %26 = vector.shape_cast %25 : vector<256xf32> to vector<1x256xf32>
      %27 = arith.addf %23, %26 : vector<1x256xf32>
      %c1_17 = arith.constant 1 : index
      %c0_18 = arith.constant 0 : index
      %28 = vector.load %arg10[%c1_17, %c0_18] : memref<2x256xf32, #tpu.memory_space<vmem>>, vector<1x256xf32>
      tpu.vector_store %arg10[%c1_17, %c0_18], %27 {strides = array<i32>} : memref<2x256xf32, #tpu.memory_space<vmem>>, vector<1x256xf32>,
    } else {
    }
    %c1_i32 = arith.constant 1 : i32
    %15 = arith.cmpi eq, %arg0, %c1_i32 : i32
    %16 = arith.extui %15 : i1 to i32
    %c0_i32_9 = arith.constant 0 : i32
    %17 = arith.cmpi ne, %16, %c0_i32_9 : i32
    scf.if %17 {
      %c0_10 = arith.constant 0 : index
      %c0_11 = arith.constant 0 : index
      %18 = vector.load %arg10[%c0_10, %c0_11] : memref<2x256xf32, #tpu.memory_space<vmem>>, vector<1x256xf32>
      %cst_12 = arith.constant 1.250000e-01 : f32
      %19 = vector.broadcast %cst_12 : f32 to vector<1x256xf32>
      %20 = arith.mulf %18, %19 : vector<1x256xf32>
      %c1 = arith.constant 1 : index
      %c0_13 = arith.constant 0 : index
      %21 = vector.load %arg10[%c1, %c0_13] : memref<2x256xf32, #tpu.memory_space<vmem>>, vector<1x256xf32>
      %cst_14 = arith.constant 1.250000e-01 : f32
      %22 = vector.broadcast %cst_14 : f32 to vector<1x256xf32>
      %23 = arith.mulf %21, %22 : vector<1x256xf32>
      %24 = arith.mulf %20, %20 : vector<1x256xf32>
      %25 = arith.subf %23, %24 : vector<1x256xf32>
      %26 = vector.broadcast %20 : vector<1x256xf32> to vector<8x256xf32>
      %27 = arith.subf %6, %26 : vector<8x256xf32>
      %cst_15 = arith.constant 9.99999974E-6 : f32
      %28 = vector.broadcast %cst_15 : f32 to vector<1x256xf32>
      %29 = arith.addf %25, %28 : vector<1x256xf32>
      %30 = math.rsqrt %29 : vector<1x256xf32>
      %31 = vector.broadcast %30 : vector<1x256xf32> to vector<8x256xf32>
      %32 = arith.mulf %27, %31 : vector<8x256xf32>
      %c1_16 = arith.constant 1 : index
      %c0_17 = arith.constant 0 : index
      %33 = vector.load %arg5[%c1_16, %c0_17] : memref<3x256xf32, #tpu.memory_space<vmem>>, vector<1x256xf32>
      %34 = vector.broadcast %33 : vector<1x256xf32> to vector<8x256xf32>
      %35 = arith.mulf %32, %34 : vector<8x256xf32>
      %c2 = arith.constant 2 : index
      %c0_18 = arith.constant 0 : index
      %36 = vector.load %arg5[%c2, %c0_18] : memref<3x256xf32, #tpu.memory_space<vmem>>, vector<1x256xf32>
      %37 = vector.broadcast %36 : vector<1x256xf32> to vector<8x256xf32>
      %38 = arith.addf %35, %37 : vector<8x256xf32>
      %cst_19 = arith.constant 0.000000e+00 : f32
      %39 = vector.broadcast %cst_19 : f32 to vector<8x256xf32>
      %40 = arith.maximumf %38, %39 : vector<8x256xf32>
      %c0_20 = arith.constant 0 : index
      %c0_21 = arith.constant 0 : index
      %41 = vector.load %arg3[%c0_20, %c0_21] : memref<8x8xf32, #tpu.memory_space<vmem>>, vector<8x8xf32>
      %42 = arith.truncf %41 : vector<8x8xf32> to vector<8x8xbf16>
      %43 = arith.truncf %40 : vector<8x256xf32> to vector<8x256xbf16>
      %c0_22 = arith.constant 0 : index
      %c0_23 = arith.constant 0 : index
      %44 = vector.load %arg6[%c0_22, %c0_23] : memref<256x128xbf16, #tpu.memory_space<vmem>>, vector<256x128xbf16>
      %cst_24 = arith.constant dense<0.000000e+00> : vector<8x128xf32>
      %45 = tpu.matmul %43, %44, %cst_24 {dimension_numbers = #tpu.dot_dimension_numbers<[1], [0], [0], [1], [0, 0, 1, 1], [], []>} : vector<8x256xbf16>, vector<256x128xbf16>, vector<8x128xf32> -> vector<8x128xf32>
      %c0_25 = arith.constant 0 : index
      %c0_26 = arith.constant 0 : index
      %46 = vector.load %arg7[%c0_25, %c0_26] : memref<8x128xbf16, #tpu.memory_space<vmem>>, vector<8x128xbf16>
      %cst_27 = arith.constant dense<0.000000e+00> : vector<8x128xf32>
      %47 = tpu.matmul %42, %46, %cst_27 {dimension_numbers = #tpu.dot_dimension_numbers<[1], [0], [0], [1], [0, 0, 1, 1], [], []>} : vector<8x8xbf16>, vector<8x128xbf16>, vector<8x128xf32> -> vector<8x128xf32>
      %48 = arith.addf %45, %47 : vector<8x128xf32>
      %c0_28 = arith.constant 0 : index
      %c0_29 = arith.constant 0 : index
      %49 = vector.load %arg8[%c0_28, %c0_29] : memref<3x128xf32, #tpu.memory_space<vmem>>, vector<1x128xf32>
      %50 = vector.broadcast %49 : vector<1x128xf32> to vector<8x128xf32>
      %51 = arith.addf %48, %50 : vector<8x128xf32>
      %cst_30 = arith.constant 0.000000e+00 : f32
      %52 = vector.broadcast %cst_30 : f32 to vector<8x128xf32>
      %53 = arith.maximumf %51, %52 : vector<8x128xf32>
      %c1_31 = arith.constant 1 : index
      %c0_32 = arith.constant 0 : index
      %54 = vector.load %arg8[%c1_31, %c0_32] : memref<3x128xf32, #tpu.memory_space<vmem>>, vector<1x128xf32>
      %55 = vector.broadcast %54 : vector<1x128xf32> to vector<8x128xf32>
      %56 = arith.mulf %53, %55 : vector<8x128xf32>
      %cst_33 = arith.constant dense<0.000000e+00> : vector<8xf32>
      %57 = vector.multi_reduction <add>, %56, %cst_33 [1] : vector<8x128xf32> to vector<8xf32>
      %58 = vector.shape_cast %57 : vector<8xf32> to vector<8x1xf32>
      %c2_34 = arith.constant 2 : index
      %c0_35 = arith.constant 0 : index
      %59 = vector.load %arg8[%c2_34, %c0_35] : memref<3x128xf32, #tpu.memory_space<vmem>>, vector<1x128xf32>
      %60 = vector.broadcast %58 : vector<8x1xf32> to vector<8x128xf32>
      %61 = vector.broadcast %59 : vector<1x128xf32> to vector<8x128xf32>
      %62 = arith.addf %60, %61 : vector<8x128xf32>
      %c0_36 = arith.constant 0 : index
      %c0_37 = arith.constant 0 : index
      %63 = vector.load %arg9[%c0_36, %c0_37] : memref<8x128xf32, #tpu.memory_space<vmem>>, vector<8x128xf32>
      tpu.vector_store %arg9[%c0_36, %c0_37], %62 {strides = array<i32>} : memref<8x128xf32, #tpu.memory_space<vmem>>, vector<8x128xf32>,
    } else {
    }
    return
  }
  func.func @transform_0(%arg0: i32, %arg1: i32) -> (i32, i32) {
    %c0_i32 = arith.constant 0 : i32
    %c0_i32_0 = arith.constant 0 : i32
    return %arg1, %c0_i32 : i32, i32
  }
  func.func @transform_1(%arg0: i32, %arg1: i32) -> (i32, i32) {
    %c0_i32 = arith.constant 0 : i32
    %c0_i32_0 = arith.constant 0 : i32
    return %arg1, %c0_i32 : i32, i32
  }
  func.func @transform_2(%arg0: i32, %arg1: i32) -> (i32, i32) {
    %c0_i32 = arith.constant 0 : i32
    %c0_i32_0 = arith.constant 0 : i32
    %c0_i32_1 = arith.constant 0 : i32
    return %c0_i32, %c0_i32_0 : i32, i32
  }
  func.func @transform_3(%arg0: i32, %arg1: i32) -> (i32, i32) {
    %c0_i32 = arith.constant 0 : i32
    %c0_i32_0 = arith.constant 0 : i32
    %c0_i32_1 = arith.constant 0 : i32
    return %c0_i32, %c0_i32_0 : i32, i32
  }
  func.func @transform_4(%arg0: i32, %arg1: i32) -> (i32, i32) {
    %c0_i32 = arith.constant 0 : i32
    %c0_i32_0 = arith.constant 0 : i32
    %c0_i32_1 = arith.constant 0 : i32
    return %c0_i32, %c0_i32_0 : i32, i32
  }
  func.func @transform_5(%arg0: i32, %arg1: i32) -> (i32, i32) {
    %c0_i32 = arith.constant 0 : i32
    %c0_i32_0 = arith.constant 0 : i32
    %c0_i32_1 = arith.constant 0 : i32
    return %c0_i32, %c0_i32_0 : i32, i32
  }
  func.func @transform_6(%arg0: i32, %arg1: i32) -> (i32, i32) {
    %c0_i32 = arith.constant 0 : i32
    %c0_i32_0 = arith.constant 0 : i32
    %c0_i32_1 = arith.constant 0 : i32
    return %c0_i32, %c0_i32_0 : i32, i32
  }
  func.func @transform_7(%arg0: i32, %arg1: i32) -> (i32, i32) {
    %c0_i32 = arith.constant 0 : i32
    %c0_i32_0 = arith.constant 0 : i32
    return %arg1, %c0_i32 : i32, i32
  }
}

</mosaic_0001>

<llo_original>
// kernel: critic_policy_forward.1
$region0: #{critic_policy_forward.1}
  #allocation0 [shape = 'u32[]', space=smem, size = 0x4, offset = 0x4, fixed_abs, tag = 'smem constant byte address 0x4 - core index']
  #allocation1 [shape = 'u32[144,128]{1,0:T(1,128)}', space=vmem, size = 0x12000, scoped, tag = 'internal scratch']
  #allocation2 [shape = 'f32[2,256]{1,0:T(2,128)}', space=vmem, size = 0x800, scoped, tag = 'scratch operand']
  %s0 = inlined_call_operand.hbm [shape: f32[8,32], index: 0, kind: input, shape index: {}]
  %s1 = inlined_call_operand.hbm [shape: f32[8,8], index: 1, kind: input, shape index: {}]
  %s2 = inlined_call_operand.hbm [shape: bf16[32,256], index: 2, kind: input, shape index: {}]
  %s3 = inlined_call_operand.hbm [shape: f32[3,256], index: 3, kind: input, shape index: {}]
  %s4 = inlined_call_operand.hbm [shape: bf16[256,128], index: 4, kind: input, shape index: {}]
  %s5 = inlined_call_operand.vmem [shape: bf16[8,128], index: 5, kind: input, shape index: {}]
  %s6 = inlined_call_operand.vmem [shape: f32[3,128], index: 6, kind: input, shape index: {}]
  %s7 = inlined_call_operand.vmem [shape: f32[8,128], index: 7, kind: output, shape index: {}]
  %s8 = sld [smem:[#allocation0]]
  $region93: #{critic_policy_forward.1} parent=0
    _
  %s10 = ssub.s32 1, %s8
  %s11 = scalar_select 0, %s10, %s8
  $region1: #{critic_policy_forward.1} parent=0
    #allocation3 [shape = 'u8[4096]{0}', space=vmem, size = 0x1000, scoped, tag = 'input window, operand 0, single buffered']
    #allocation4 [shape = 's32[2]{0}', space=sflag, size = 0x8, scoped, tag = 'scoped memory for critic_policy_forward.1']
    #allocation5 [shape = 'u8[4096]{0}', space=vmem, size = 0x1000, scoped, tag = 'input window, operand 1, single buffered']
    #allocation6 [shape = 's32[1]{0}', space=sflag, size = 0x4, scoped, tag = 'scoped memory for critic_policy_forward.1']
    #allocation7 [shape = 'u8[16384]{0}', space=vmem, size = 0x4000, scoped, tag = 'input window, operand 2, single buffered']
    #allocation8 [shape = 'u8[4096]{0}', space=vmem, size = 0x1000, scoped, tag = 'input window, operand 3, single buffered']
    #allocation9 [shape = 's32[1]{0}', space=sflag, size = 0x4, scoped, tag = 'scoped memory for critic_policy_forward.1']
    #allocation10 [shape = 'u8[65536]{0}', space=vmem, size = 0x10000, scoped, tag = 'input window, operand 4, single buffered']
    %12 = vsyncpa [#allocation4], 0
    %13 = vsyncpa [#allocation6], 0
    %14 = vsyncpa [#allocation9], 0
    loop: start=0, step=1, limit=4
    $region2: #{critic_policy_forward.1} parent=1 // loop_pre_header
      _
    $region3: #{critic_policy_forward.1} parent=1 // loop_header
      %s16 = sphi 0, %s20
      %p17 = scmp.ge.s32.totalorder %s16, 4
      %s23 = sphi 0, %s35
      %s24 = sphi 0, %s31
      %s25 = sphi 0, %s23
      %s26 = sphi 0, %s24
      %s27 = sphi 0, %s25
      %s28 = sphi 0, %s26
      %s38 = sphi 0, %s40
      %s41 = sphi 0, %s38
      %s42 = sphi 0, %s41
      %s58 = sphi 0, %s42
      %s64 = sphi 0, %s66
      %s67 = sphi 0, %s64
      %s68 = sphi 0, %s67
      %s84 = sphi 0, %s68
      %s88 = sphi 0, %s88
      %s90 = sphi 0, %s88
      %s91 = sphi 0, %s90
      %s105 = sphi 0, %s91
      %s109 = sphi 0, %s109
      %s111 = sphi 0, %s109
      %s112 = sphi 0, %s111
      %s126 = sphi 0, %s112
      %s130 = sphi 0, %s130
      %s132 = sphi 0, %s130
      %s133 = sphi 0, %s132
      %s147 = sphi 0, %s133
      %s151 = sphi 0, %s151
      %s153 = sphi 0, %s151
      %s154 = sphi 0, %s153
      %s168 = sphi 0, %s154
      %s172 = sphi 0, %s172
      %s174 = sphi 0, %s172
      %s175 = sphi 0, %s174
      %s189 = sphi 0, %s175
      %s195 = sphi 0, %s197
      %s198 = sphi 0, %s195
      %s199 = sphi 0, %s198
      %s215 = sphi 0, %s199
    $region4: #{critic_policy_forward.1} parent=1 // loop_header_branch
      %19 = sbr.rel (%p17) target = $region8
    $region5: #{critic_policy_forward.1} parent=1 // loop_body
      %s21 = ssub.s32 %s16, 1
      %s22 = ssub.s32 %s16, 2
      %s29 = sadd.s32 1, %s24
      %p30 = scmp.ge.s32.totalorder %s29, 1
      %s31 = scalar_select %p30, 0, %s29
      %s32 = sadd.s32 1, %s23
      %s33 = scalar_select %p30, %s32, %s23
      %p34 = scmp.ge.s32.totalorder %s33, 2
      %s35 = scalar_select %p34, 0, %s33
      %s36 = ssub.s32 %s24, %s31
      %p37 = scmp.eq.s32.totalorder %s36, 0
      %s39 = sadd.s32 %s38, 1
      %s40 = scalar_select %p37, %s38, %s39
      %p43 = pneg %p37
      %p44 = scmp.eq.s32.totalorder %s16, 1
      %p45 = por %p43, %p44
      %p46 = scmp.ne.s32.totalorder %s38, %s41
      %p47 = scmp.eq.s32.totalorder %s16, 0
      %p48 = por %p46, %p47
      %p49 = scmp.ne.s32.totalorder %s38, %s41
      %p50 = scmp.eq.s32.totalorder %s21, 1
      %p51 = por %p49, %p50
      %p52 = scmp.ne.s32.totalorder %s41, %s42
      %p53 = scmp.eq.s32.totalorder %s21, 0
      %p54 = por %p52, %p53
      %p55 = scmp.ne.s32.totalorder %s41, %s42
      %p56 = scmp.eq.s32.totalorder %s22, 1
      %p57 = por %p55, %p56
      %p59 = scmp.ne.s32.totalorder %s42, %s58
      %p60 = scmp.eq.s32.totalorder %s22, 0
      %p61 = por %p59, %p60
      %s62 = ssub.s32 %s24, %s31
      %p63 = scmp.eq.s32.totalorder %s62, 0
      %s65 = sadd.s32 %s64, 1
      %s66 = scalar_select %p63, %s64, %s65
      %p69 = pneg %p63
      %p70 = scmp.eq.s32.totalorder %s16, 1
      %p71 = por %p69, %p70
      %p72 = scmp.ne.s32.totalorder %s64, %s67
      %p73 = scmp.eq.s32.totalorder %s16, 0
      %p74 = por %p72, %p73
      %p75 = scmp.ne.s32.totalorder %s64, %s67
      %p76 = scmp.eq.s32.totalorder %s21, 1
      %p77 = por %p75, %p76
      %p78 = scmp.ne.s32.totalorder %s67, %s68
      %p79 = scmp.eq.s32.totalorder %s21, 0
      %p80 = por %p78, %p79
      %p81 = scmp.ne.s32.totalorder %s67, %s68
      %p82 = scmp.eq.s32.totalorder %s22, 1
      %p83 = por %p81, %p82
      %p85 = scmp.ne.s32.totalorder %s68, %s84
      %p86 = scmp.eq.s32.totalorder %s22, 0
      %p87 = por %p85, %p86
      %s89 = sadd.s32 %s88, 1
      %p92 = scmp.eq.s32.totalorder %s16, 1
      %p93 = scmp.ne.s32.totalorder %s88, %s90
      %p94 = scmp.eq.s32.totalorder %s16, 0
      %p95 = por %p93, %p94
      %p96 = scmp.ne.s32.totalorder %s88, %s90
      %p97 = scmp.eq.s32.totalorder %s21, 1
      %p98 = por %p96, %p97
      %p99 = scmp.ne.s32.totalorder %s90, %s91
      %p100 = scmp.eq.s32.totalorder %s21, 0
      %p101 = por %p99, %p100
      %p102 = scmp.ne.s32.totalorder %s90, %s91
      %p103 = scmp.eq.s32.totalorder %s22, 1
      %p104 = por %p102, %p103
      %p106 = scmp.ne.s32.totalorder %s91, %s105
      %p107 = scmp.eq.s32.totalorder %s22, 0
      %p108 = por %p106, %p107
      %s110 = sadd.s32 %s109, 1
      %p113 = scmp.eq.s32.totalorder %s16, 1
      %p114 = scmp.ne.s32.totalorder %s109, %s111
      %p115 = scmp.eq.s32.totalorder %s16, 0
      %p116 = por %p114, %p115
      %p117 = scmp.ne.s32.totalorder %s109, %s111
      %p118 = scmp.eq.s32.totalorder %s21, 1
      %p119 = por %p117, %p118
      %p120 = scmp.ne.s32.totalorder %s111, %s112
      %p121 = scmp.eq.s32.totalorder %s21, 0
      %p122 = por %p120, %p121
      %p123 = scmp.ne.s32.totalorder %s111, %s112
      %p124 = scmp.eq.s32.totalorder %s22, 1
      %p125 = por %p123, %p124
      %p127 = scmp.ne.s32.totalorder %s112, %s126
      %p128 = scmp.eq.s32.totalorder %s22, 0
      %p129 = por %p127, %p128
      %s131 = sadd.s32 %s130, 1
      %p134 = scmp.eq.s32.totalorder %s16, 1
      %p135 = scmp.ne.s32.totalorder %s130, %s132
      %p136 = scmp.eq.s32.totalorder %s16, 0
      %p137 = por %p135, %p136
      %p138 = scmp.ne.s32.totalorder %s130, %s132
      %p139 = scmp.eq.s32.totalorder %s21, 1
      %p140 = por %p138, %p139
      %p141 = scmp.ne.s32.totalorder %s132, %s133
      %p142 = scmp.eq.s32.totalorder %s21, 0
      %p143 = por %p141, %p142
      %p144 = scmp.ne.s32.totalorder %s132, %s133
      %p145 = scmp.eq.s32.totalorder %s22, 1
      %p146 = por %p144, %p145
      %p148 = scmp.ne.s32.totalorder %s133, %s147
      %p149 = scmp.eq.s32.totalorder %s22, 0
      %p150 = por %p148, %p149
      %s152 = sadd.s32 %s151, 1
      %p155 = scmp.eq.s32.totalorder %s16, 1
      %p156 = scmp.ne.s32.totalorder %s151, %s153
      %p157 = scmp.eq.s32.totalorder %s16, 0
      %p158 = por %p156, %p157
      %p159 = scmp.ne.s32.totalorder %s151, %s153
      %p160 = scmp.eq.s32.totalorder %s21, 1
      %p161 = por %p159, %p160
      %p162 = scmp.ne.s32.totalorder %s153, %s154
      %p163 = scmp.eq.s32.totalorder %s21, 0
      %p164 = por %p162, %p163
      %p165 = scmp.ne.s32.totalorder %s153, %s154
      %p166 = scmp.eq.s32.totalorder %s22, 1
      %p167 = por %p165, %p166
      %p169 = scmp.ne.s32.totalorder %s154, %s168
      %p170 = scmp.eq.s32.totalorder %s22, 0
      %p171 = por %p169, %p170
      %s173 = sadd.s32 %s172, 1
      %p176 = scmp.eq.s32.totalorder %s16, 1
      %p177 = scmp.ne.s32.totalorder %s172, %s174
      %p178 = scmp.eq.s32.totalorder %s16, 0
      %p179 = por %p177, %p178
      %p180 = scmp.ne.s32.totalorder %s172, %s174
      %p181 = scmp.eq.s32.totalorder %s21, 1
      %p182 = por %p180, %p181
      %p183 = scmp.ne.s32.totalorder %s174, %s175
      %p184 = scmp.eq.s32.totalorder %s21, 0
      %p185 = por %p183, %p184
      %p186 = scmp.ne.s32.totalorder %s174, %s175
      %p187 = scmp.eq.s32.totalorder %s22, 1
      %p188 = por %p186, %p187
      %p190 = scmp.ne.s32.totalorder %s175, %s189
      %p191 = scmp.eq.s32.totalorder %s22, 0
      %p192 = por %p190, %p191
      %s193 = ssub.s32 %s24, %s31
      %p194 = scmp.eq.s32.totalorder %s193, 0
      %s196 = sadd.s32 %s195, 1
      %s197 = scalar_select %p194, %s195, %s196
      %p200 = pneg %p194
      %p201 = scmp.eq.s32.totalorder %s16, 1
      %p202 = por %p200, %p201
      %p203 = scmp.ne.s32.totalorder %s195, %s198
      %p204 = scmp.eq.s32.totalorder %s16, 0
      %p205 = por %p203, %p204
      %p206 = scmp.ne.s32.totalorder %s195, %s198
      %p207 = scmp.eq.s32.totalorder %s21, 1
      %p208 = por %p206, %p207
      %p209 = scmp.ne.s32.totalorder %s198, %s199
      %p210 = scmp.eq.s32.totalorder %s21, 0
      %p211 = por %p209, %p210
      %p212 = scmp.ne.s32.totalorder %s198, %s199
      %p213 = scmp.eq.s32.totalorder %s22, 1
      %p214 = por %p212, %p213
      %p216 = scmp.ne.s32.totalorder %s199, %s215
      %p217 = scmp.eq.s32.totalorder %s22, 0
      %p218 = por %p216, %p217
      %p219 = scmp.le.s32.totalorder 1, %s16
      %p220 = scmp.lt.s32.totalorder %s16, 3
      %p221 = pnand %p219, %p220
      %p222 = pneg %p221
      // Predicated region
      $region9: #{critic_policy_forward.1} parent=5 // pred_check
        _
      $region10: #{critic_policy_forward.1} parent=5 // pred_check_branch
        %224 = sbr.rel (%p221) target = $region12
      $region11: #{critic_policy_forward.1} parent=5 // pred_region
        %s225 = ssub.s32 %s16, 1
        // Predicated region
        $region13: #{critic_policy_forward.1} parent=11 // pred_check
          %p226 = pneg %p54
        $region14: #{critic_policy_forward.1} parent=11 // pred_check_branch
          %228 = sbr.rel (%p226) target = $region16
        $region15: #{critic_policy_forward.1} parent=11 // pred_region
          %s230 = ssub.s32 128, 128
          %231 = vsyncadd [#allocation4], %s230
          %s232 = smul.addr %s26, 128
          %s233 = scalar_lea.hbm %s0, %s232
          %s235 = sshll.u32 [#allocation3], 4
          %s236 = int_to_ptr.vmem [resolvable:$true] %s235
          %238 = dma.hbm_to_vmem [thread:$0]  %s233, 128, %s236, [#allocation4]
        $region16: #{critic_policy_forward.1} parent=11 // pred_fallthru
          _
        // Predicated region
        $region17: #{critic_policy_forward.1} parent=11 // pred_check
          %p239 = pneg %p80
        $region18: #{critic_policy_forward.1} parent=11 // pred_check_branch
          %241 = sbr.rel (%p239) target = $region20
        $region19: #{critic_policy_forward.1} parent=11 // pred_region
          %s243 = ssub.s32 128, 128
          %244 = vsyncadd [#allocation6], %s243
          %s245 = smul.addr %s26, 128
          %s246 = scalar_lea.hbm %s1, %s245
          %s248 = sshll.u32 [#allocation5], 4
          %s249 = int_to_ptr.vmem [resolvable:$true] %s248
          %251 = dma.hbm_to_vmem [thread:$0]  %s246, 128, %s249, [#allocation6]
        $region20: #{critic_policy_forward.1} parent=11 // pred_fallthru
          _
        // Predicated region
        $region21: #{critic_policy_forward.1} parent=11 // pred_check
          %p252 = pneg %p101
        $region22: #{critic_policy_forward.1} parent=11 // pred_check_branch
          %254 = sbr.rel (%p252) target = $region24
        $region23: #{critic_policy_forward.1} parent=11 // pred_region
          %s256 = ssub.s32 512, 512
          %257 = vsyncadd [#allocation6], %s256
          %s258 = sshll.u32 [#allocation7], 4
          %s259 = int_to_ptr.vmem [resolvable:$true] %s258
          %264 = dma.hbm_to_vmem [thread:$0]  %s2, 512, %s259, [#allocation6], 128, 128, 8
        $region24: #{critic_policy_forward.1} parent=11 // pred_fallthru
          _
        // Predicated region
        $region25: #{critic_policy_forward.1} parent=11 // pred_check
          %p265 = pneg %p122
        $region26: #{critic_policy_forward.1} parent=11 // pred_check_branch
          %267 = sbr.rel (%p265) target = $region28
        $region27: #{critic_policy_forward.1} parent=11 // pred_region
          %s269 = ssub.s32 128, 128
          %270 = vsyncadd [#allocation9], %s269
          %s272 = sshll.u32 [#allocation8], 4
          %s273 = int_to_ptr.vmem [resolvable:$true] %s272
          %275 = dma.hbm_to_vmem [thread:$0]  %s3, 128, %s273, [#allocation9]
        $region28: #{critic_policy_forward.1} parent=11 // pred_fallthru
          _
        // Predicated region
        $region29: #{critic_policy_forward.1} parent=11 // pred_check
          %p276 = pneg %p143
        $region30: #{critic_policy_forward.1} parent=11 // pred_check_branch
          %278 = sbr.rel (%p276) target = $region32
        $region31: #{critic_policy_forward.1} parent=11 // pred_region
          %s280 = ssub.s32 2048, 2048
          %281 = vsyncadd [#allocation9], %s280
          %s282 = sshll.u32 [#allocation10], 4
          %s283 = int_to_ptr.vmem [resolvable:$true] %s282
          %288 = dma.hbm_to_vmem [thread:$0]  %s4, 2048, %s283, [#allocation9], 64, 64, 4
        $region32: #{critic_policy_forward.1} parent=11 // pred_fallthru
          _
        // Predicated region
        $region33: #{critic_policy_forward.1} parent=11 // pred_check
          %p289 = pneg %p164
        $region34: #{critic_policy_forward.1} parent=11 // pred_check_branch
          %291 = sbr.rel (%p289) target = $region36
        $region35: #{critic_policy_forward.1} parent=11 // pred_region
          _
        $region36: #{critic_policy_forward.1} parent=11 // pred_fallthru
          _
        // Predicated region
        $region37: #{critic_policy_forward.1} parent=11 // pred_check
          %p292 = pneg %p185
        $region38: #{critic_policy_forward.1} parent=11 // pred_check_branch
          %294 = sbr.rel (%p292) target = $region40
        $region39: #{critic_policy_forward.1} parent=11 // pred_region
          _
        $region40: #{critic_policy_forward.1} parent=11 // pred_fallthru
          _
      $region12: #{critic_policy_forward.1} parent=5 // pred_fallthru
        _
      %p295 = scmp.lt.s32.totalorder %s16, 2
      // Predicated region
      $region41: #{critic_policy_forward.1} parent=5 // pred_check
        %p296 = pneg %p295
      $region42: #{critic_policy_forward.1} parent=5 // pred_check_branch
        %298 = sbr.rel (%p296) target = $region44
      $region43: #{critic_policy_forward.1} parent=5 // pred_region
        _
      $region44: #{critic_policy_forward.1} parent=5 // pred_fallthru
        _
      %p299 = scmp.le.s32.totalorder 1, %s16
      %p300 = scmp.lt.s32.totalorder %s16, 3
      %p301 = pnand %p299, %p300
      %p302 = pneg %p301
      // Predicated region
      $region45: #{critic_policy_forward.1} parent=5 // pred_check
        _
      $region46: #{critic_policy_forward.1} parent=5 // pred_check_branch
        %304 = sbr.rel (%p301) target = $region48
      $region47: #{critic_policy_forward.1} parent=5 // pred_region
        %s305 = ssub.s32 %s16, 1
        // Predicated region
        $region49: #{critic_policy_forward.1} parent=47 // pred_check
          %p306 = pneg %p54
        $region50: #{critic_policy_forward.1} parent=47 // pred_check_branch
          %308 = sbr.rel (%p306) target = $region52
        $region51: #{critic_policy_forward.1} parent=47 // pred_region
          %309 = dma.done [#allocation4], 128
        $region52: #{critic_policy_forward.1} parent=47 // pred_fallthru
          _
        // Predicated region
        $region53: #{critic_policy_forward.1} parent=47 // pred_check
          %p310 = pneg %p80
        $region54: #{critic_policy_forward.1} parent=47 // pred_check_branch
          %312 = sbr.rel (%p310) target = $region56
        $region55: #{critic_policy_forward.1} parent=47 // pred_region
          %313 = dma.done [#allocation6], 128
        $region56: #{critic_policy_forward.1} parent=47 // pred_fallthru
          _
        // Predicated region
        $region57: #{critic_policy_forward.1} parent=47 // pred_check
          %p314 = pneg %p101
        $region58: #{critic_policy_forward.1} parent=47 // pred_check_branch
          %316 = sbr.rel (%p314) target = $region60
        $region59: #{critic_policy_forward.1} parent=47 // pred_region
          %317 = dma.done [#allocation6], 512
        $region60: #{critic_policy_forward.1} parent=47 // pred_fallthru
          _
        // Predicated region
        $region61: #{critic_policy_forward.1} parent=47 // pred_check
          %p318 = pneg %p122
        $region62: #{critic_policy_forward.1} parent=47 // pred_check_branch
          %320 = sbr.rel (%p318) target = $region64
        $region63: #{critic_policy_forward.1} parent=47 // pred_region
          %321 = dma.done [#allocation9], 128
        $region64: #{critic_policy_forward.1} parent=47 // pred_fallthru
          _
        // Predicated region
        $region65: #{critic_policy_forward.1} parent=47 // pred_check
          %p322 = pneg %p143
        $region66: #{critic_policy_forward.1} parent=47 // pred_check_branch
          %324 = sbr.rel (%p322) target = $region68
        $region67: #{critic_policy_forward.1} parent=47 // pred_region
          %325 = dma.done [#allocation9], 2048
        $region68: #{critic_policy_forward.1} parent=47 // pred_fallthru
          _
        %p326 = pneg %p54
        %p327 = pneg %p51
        %p328 = pneg %p80
        %p329 = pneg %p77
        %p330 = pneg %p101
        %p331 = pneg %p98
        %p332 = pneg %p122
        %p333 = pneg %p119
        %p334 = pneg %p143
        %p335 = pneg %p140
        %p336 = pneg %p164
        %p337 = pneg %p161
        %p338 = pneg %p185
        %p339 = pneg %p182
        %p340 = pneg %p211
        %p341 = pneg %p208
        %p342 = scmp.lt.s32.totalorder %s26, 0
        %s343 = scalar_select %p342, %s26, 0
        %s344 = smul.addr %s343, 8
        %s345 = scalar_lea.vmem %s7, %s344
        %p346 = scmp.lt.s32.totalorder %s26, 0
        %s347 = scalar_select %p346, %s26, 0
        %s348 = smul.addr %s347, 8
        %s349 = scalar_lea.vmem %s7, %s348
        %v351 = vld [vmem:[#allocation3] sm:$0xff]
        %v352 = vpack.c.bf16 %v351, %v351
        %v353 = vld [vmem:[#allocation7] sm:$0xff]
        %v354 = vld [vmem:[#allocation7 + $0x8] sm:$0xff]
        %v355 = vld [vmem:[#allocation7 + $0x10] sm:$0xff]
        %v356 = vld [vmem:[#allocation7 + $0x18] sm:$0xff]
        %v357 = vld [vmem:[#allocation8] ss:$4 sm:$0x3]
        %v359 = vlaneseq
        %v360 = vshrl.u32 %v359, 7
        %v361 = vsub.s32 0, %v360
        %v362 = vrot.slane %v357, %v361
        %v363 = vlaneseq
        %v364 = vshrl.u32 %v363, 7
        %v365 = vsub.s32 1, %v364
        %v366 = vrot.slane %v357, %v365
        %v373 = vunpack.c.l.b16 %v353
        %v374 = vunpack.c.h.b16 %v353
        %v375 = vunpack.c.l.b16 %v354
        %v376 = vunpack.c.h.b16 %v354
        %v377 = vunpack.c.l.b16 %v355
        %v378 = vunpack.c.h.b16 %v355
        %v379 = vunpack.c.l.b16 %v356
        %v380 = vunpack.c.h.b16 %v356
        %v381 = vpack.c.b16 %v375, %v373
        %v382 = vpack.c.b16 %v376, %v374
        %v383 = vpack.c.b16 %v379, %v377
        %v384 = vpack.c.b16 %v380, %v378
        %vm389 = vcmask 261120
        %v391 = vsel %vm389, %v352, 0
        %393 = vmatprep.subr.bf16.mxu0 0
        %394 = vmatpush1.bf16.msra.mxu0 0
        %395 = vmatprep.subr.bf16.mxu0 0
        %396 = vmatpush1.bf16.msra.mxu0 0
        %397 = vmatprep.subr.bf16.mxu0 0
        %398 = vmatpush1.bf16.msra.mxu0 0
        %399 = vmatprep.subr.bf16.mxu0 0
        %400 = vmatpush1.bf16.msra.mxu0 0
        %401 = vmatprep.subr.bf16.mxu0 0
        %402 = vmatpush1.bf16.msra.mxu0 0
        %403 = vmatprep.subr.bf16.mxu0 0
        %404 = vmatpush1.bf16.msra.mxu0 0
        %405 = vmatprep.subr.bf16.mxu0 %v384
        %406 = vmatpush1.bf16.msra.mxu0 %v383
        %407 = vmatprep.subr.bf16.mxu0 %v382
        %408 = vmatpush1.bf16.msra.mxu0 %v381
        %409 = vmatprep.subr.bf16.mxu0 0
        %410 = vmatpush2.bf16.msra.mxu0 0
        %411 = vmatprep.subr.bf16.mxu0 0
        %412 = vmatpush2.bf16.msra.mxu0 0
        %413 = vmatprep.subr.bf16.mxu0 0
        %414 = vmatpush2.bf16.msra.mxu0 0
        %415 = vmatprep.subr.bf16.mxu0 0
        %416 = vmatpush2.bf16.msra.mxu0 0
        %417 = vmatprep.subr.bf16.mxu0 0
        %418 = vmatpush2.bf16.msra.mxu0 0
        %419 = vmatprep.subr.bf16.mxu0 0
        %420 = vmatpush2.bf16.msra.mxu0 0
        %421 = vmatprep.subr.bf16.mxu0 0
        %422 = vmatpush2.bf16.msra.mxu0 0
        %423 = vmatprep.subr.bf16.mxu0 0
        %424 = vmatpush2.bf16.msra.mxu0 0
        %425 = vmatprep.mubr.bf16.mxu0 0
        %426 = vmatmul.mubr.bf16.gmra.mxu0 %v391
        %v427 = vpop.f32.mrf.mxu0
        %v428 = vadd.f32 %v362, %v427
        %v429 = vpop.f32.mrf.mxu0
        %v430 = vadd.f32 %v366, %v429
        %v431 = vpop.f32.mrf.mxu0
        %v432 = vpop.f32.mrf.mxu0
        %433 = vdwg.mxu0
        %p434 = scmp.eq.s32.totalorder %s25, 0
        %p435 = scmp.eq.s32.totalorder %s26, 0
        %p436 = pnand %p434, %p435
        %p437 = pneg %p436
        // Predicated region
        $region69: #{critic_policy_forward.1} parent=47 // pred_check
          _
        $region70: #{critic_policy_forward.1} parent=47 // pred_check_branch
          %439 = sbr.rel (%p436) target = $region72
        $region71: #{critic_policy_forward.1} parent=47 // pred_region
          %440 = vst [vmem:[#allocation2] sm:$0xf] 0.0
        $region72: #{critic_policy_forward.1} parent=47 // pred_fallthru
          _
        // Predicated region
        $region73: #{critic_policy_forward.1} parent=47 // pred_check
          %p441 = pneg %p434
        $region74: #{critic_policy_forward.1} parent=47 // pred_check_branch
          %443 = sbr.rel (%p441) target = $region76
        $region75: #{critic_policy_forward.1} parent=47 // pred_region
          %v444 = vld [vmem:[#allocation2] ss:$2 sm:$0x3]
          %v445 = vrot.slane %v428, 4
          %v446 = vadd.f32 %v428, %v445
          %v447 = vrot.slane %v446, 2
          %v448 = vadd.f32 %v446, %v447
          %v449 = vrot.slane %v448, 1
          %v450 = vadd.f32 %v448, %v449
          %v451 = vrot.slane %v430, 4
          %v452 = vadd.f32 %v430, %v451
          %v453 = vrot.slane %v452, 2
          %v454 = vadd.f32 %v452, %v453
          %v455 = vrot.slane %v454, 1
          %v456 = vadd.f32 %v454, %v455
          %v459 = vcombine.low %v450, %v456
          %v461 = vunpack.c.l.s4 1966171168
          %v462 = vunpack.c.0.s8 %v461
          %v463 = vlaneseq
          %v464 = vshrl.u32 %v463, 7
          %v465 = vsub.s32 %v462, %v464
          %v466 = vrot.slane %v459, %v465
          %v468 = vunpack.c.l.s4 1966171168
          %v469 = vunpack.c.0.s8 %v468
          %v470 = vlaneseq
          %v471 = vshrl.u32 %v470, 7
          %v472 = vsub.s32 %v469, %v471
          %v473 = vrot.slane %v466, %v472
          %v475 = vadd.f32 %v444, %v473
          %v476 = vlaneseq
          %vm477 = vcmp.ge.s32.totalorder %v476, 0
          %vm478 = vcmp.lt.s32.totalorder %v476, 256
          %vm479 = vmand %vm477, %vm478
          %480 = vst.msk [vmem:[#allocation2] ss:$2 sm:$0x3] %vm479, %v475
          %s481 = scalar_lea.vmem [#allocation2], 1
          %v482 = vld [vmem:[%s481] ss:$2 sm:$0x3]
          %v483 = vmul.f32 %v428, %v428
          %v484 = vmul.f32 %v430, %v430
          %v485 = vrot.slane %v483, 4
          %v486 = vadd.f32 %v483, %v485
          %v487 = vrot.slane %v486, 2
          %v488 = vadd.f32 %v486, %v487
          %v489 = vrot.slane %v488, 1
          %v490 = vadd.f32 %v488, %v489
          %v491 = vrot.slane %v484, 4
          %v492 = vadd.f32 %v484, %v491
          %v493 = vrot.slane %v492, 2
          %v494 = vadd.f32 %v492, %v493
          %v495 = vrot.slane %v494, 1
          %v496 = vadd.f32 %v494, %v495
          %v499 = vcombine.low %v490, %v496
          %v501 = vunpack.c.l.s4 1966171168
          %v502 = vunpack.c.0.s8 %v501
          %v503 = vlaneseq
          %v504 = vshrl.u32 %v503, 7
          %v505 = vsub.s32 %v502, %v504
          %v506 = vrot.slane %v499, %v505
          %v508 = vunpack.c.l.s4 1966171168
          %v509 = vunpack.c.0.s8 %v508
          %v510 = vlaneseq
          %v511 = vshrl.u32 %v510, 7
          %v512 = vsub.s32 %v509, %v511
          %v513 = vrot.slane %v506, %v512
          %v515 = vadd.f32 %v482, %v513
          %516 = vst.msk [vmem:[%s481] ss:$2 sm:$0x3] %vm479, %v515
        $region76: #{critic_policy_forward.1} parent=47 // pred_fallthru
          _
        %p517 = scmp.eq.s32.totalorder %s25, 1
        // Predicated region
        $region77: #{critic_policy_forward.1} parent=47 // pred_check
          %p518 = pneg %p517
        $region78: #{critic_policy_forward.1} parent=47 // pred_check_branch
          %520 = sbr.rel (%p518) target = $region80
        $region79: #{critic_policy_forward.1} parent=47 // pred_region
          %v521 = vld [vmem:[#allocation2] ss:$2 sm:$0x3]
          %v522 = vmul.f32 %v521, 0.125
          %s523 = scalar_lea.vmem [#allocation2], 1
          %v524 = vld [vmem:[%s523] ss:$2 sm:$0x3]
          %v525 = vmul.f32 %v524, 0.125
          %v526 = vmul.f32 %v522, %v522
          %v527 = vsub.f32 %v525, %v526
          %v529 = vlaneseq
          %v530 = vshrl.u32 %v529, 7
          %v531 = vsub.s32 0, %v530
          %v532 = vrot.slane %v522, %v531
          %v533 = vlaneseq
          %v534 = vshrl.u32 %v533, 7
          %v535 = vsub.s32 1, %v534
          %v536 = vrot.slane %v522, %v535
          %v539 = vsub.f32 %v428, %v532
          %v540 = vsub.f32 %v430, %v536
          %v541 = vadd.f32 %v527, 1e-05
          %v542 = vrsqrt.pop %v541
          %v544 = vlaneseq
          %v545 = vshrl.u32 %v544, 7
          %v546 = vsub.s32 0, %v545
          %v547 = vrot.slane %v542, %v546
          %v548 = vlaneseq
          %v549 = vshrl.u32 %v548, 7
          %v550 = vsub.s32 1, %v549
          %v551 = vrot.slane %v542, %v550
          %v554 = vmul.f32 %v539, %v547
          %v555 = vmul.f32 %v540, %v551
          %s556 = scalar_lea.vmem [#allocation8], 1
          %v557 = vld [vmem:[%s556] ss:$4 sm:$0x3]
          %v559 = vlaneseq
          %v560 = vshrl.u32 %v559, 7
          %v561 = vsub.s32 0, %v560
          %v562 = vrot.slane %v557, %v561
          %v563 = vlaneseq
          %v564 = vshrl.u32 %v563, 7
          %v565 = vsub.s32 1, %v564
          %v566 = vrot.slane %v557, %v565
          %v569 = vmul.f32 %v554, %v562
          %v570 = vmul.f32 %v555, %v566
          %s571 = scalar_lea.vmem [#allocation8], 2
          %v572 = vld [vmem:[%s571] ss:$4 sm:$0x3]
          %v574 = vlaneseq
          %v575 = vshrl.u32 %v574, 7
          %v576 = vsub.s32 0, %v575
          %v577 = vrot.slane %v572, %v576
          %v578 = vlaneseq
          %v579 = vshrl.u32 %v578, 7
          %v580 = vsub.s32 1, %v579
          %v581 = vrot.slane %v572, %v580
          %v584 = vadd.f32 %v569, %v577
          %v585 = vadd.f32 %v570, %v581
          %v586 = vmax.f32 %v584, 0.0
          %v587 = vmax.f32 %v585, 0.0
          %v588 = vld [vmem:[#allocation5] sm:$0xff]
          %v589 = vpack.c.bf16 %v588, %v588
          %v590 = vpack.c.bf16 %v586, %v586
          %v591 = vpack.c.bf16 %v587, %v587
          %v592 = vld [vmem:[#allocation10] sm:$0xf]
          %v593 = vld [vmem:[#allocation10 + $0x4] sm:$0xf]
          %v594 = vld [vmem:[#allocation10 + $0x8] sm:$0xf]
          %v595 = vld [vmem:[#allocation10 + $0xc] sm:$0xf]
          %v596 = vld [vmem:[#allocation10 + $0x10] sm:$0xf]
          %v597 = vld [vmem:[#allocation10 + $0x14] sm:$0xf]
          %v598 = vld [vmem:[#allocation10 + $0x18] sm:$0xf]
          %v599 = vld [vmem:[#allocation10 + $0x1c] sm:$0xf]
          %v600 = vld [vmem:[#allocation10 + $0x20] sm:$0xf]
          %v601 = vld [vmem:[#allocation10 + $0x24] sm:$0xf]
          %v602 = vld [vmem:[#allocation10 + $0x28] sm:$0xf]
          %v603 = vld [vmem:[#allocation10 + $0x2c] sm:$0xf]
          %v604 = vld [vmem:[#allocation10 + $0x30] sm:$0xf]
          %v605 = vld [vmem:[#allocation10 + $0x34] sm:$0xf]
          %v606 = vld [vmem:[#allocation10 + $0x38] sm:$0xf]
          %v607 = vld [vmem:[#allocation10 + $0x3c] sm:$0xf]
          %v608 = vld [vmem:[#allocation10 + $0x40] sm:$0xf]
          %v609 = vld [vmem:[#allocation10 + $0x44] sm:$0xf]
          %v610 = vld [vmem:[#allocation10 + $0x48] sm:$0xf]
          %v611 = vld [vmem:[#allocation10 + $0x4c] sm:$0xf]
          %v612 = vld [vmem:[#allocation10 + $0x50] sm:$0xf]
          %v613 = vld [vmem:[#allocation10 + $0x54] sm:$0xf]
          %v614 = vld [vmem:[#allocation10 + $0x58] sm:$0xf]
          %v615 = vld [vmem:[#allocation10 + $0x5c] sm:$0xf]
          %v616 = vld [vmem:[#allocation10 + $0x60] sm:$0xf]
          %v617 = vld [vmem:[#allocation10 + $0x64] sm:$0xf]
          %v618 = vld [vmem:[#allocation10 + $0x68] sm:$0xf]
          %v619 = vld [vmem:[#allocation10 + $0x6c] sm:$0xf]
          %v620 = vld [vmem:[#allocation10 + $0x70] sm:$0xf]
          %v621 = vld [vmem:[#allocation10 + $0x74] sm:$0xf]
          %v622 = vld [vmem:[#allocation10 + $0x78] sm:$0xf]
          %v623 = vld [vmem:[#allocation10 + $0x7c] sm:$0xf]
          %v624 = vld [vmem:[%s5] sm:$0xf]
          %vm625 = vcmask 64512
          %v627 = vsel %vm625, %v589, 0
          %vm629 = vcmask 1043456
          %v631 = vsel %vm629, %v624, 0
          %633 = vmatprep.subr.bf16.mxu0 0
          %634 = vmatpush1.bf16.msra.mxu0 0
          %635 = vmatprep.subr.bf16.mxu0 0
          %636 = vmatpush1.bf16.msra.mxu0 0
          %637 = vmatprep.subr.bf16.mxu0 0
          %638 = vmatpush1.bf16.msra.mxu0 0
          %639 = vmatprep.subr.bf16.mxu0 0
          %640 = vmatpush1.bf16.msra.mxu0 0
          %641 = vmatprep.subr.bf16.mxu0 0
          %642 = vmatpush1.bf16.msra.mxu0 0
          %643 = vmatprep.subr.bf16.mxu0 0
          %644 = vmatpush1.bf16.msra.mxu0 0
          %645 = vmatprep.subr.bf16.mxu0 0
          %646 = vmatpush1.bf16.msra.mxu0 0
          %647 = vmatprep.subr.bf16.mxu0 0
          %648 = vmatpush1.bf16.msra.mxu0 %v631
          %649 = vmatprep.subr.bf16.mxu0 0
          %650 = vmatpush2.bf16.msra.mxu0 0
          %651 = vmatprep.subr.bf16.mxu0 0
          %652 = vmatpush2.bf16.msra.mxu0 0
          %653 = vmatprep.subr.bf16.mxu0 0
          %654 = vmatpush2.bf16.msra.mxu0 0
          %655 = vmatprep.subr.bf16.mxu0 0
          %656 = vmatpush2.bf16.msra.mxu0 0
          %657 = vmatprep.subr.bf16.mxu0 0
          %658 = vmatpush2.bf16.msra.mxu0 0
          %659 = vmatprep.subr.bf16.mxu0 0
          %660 = vmatpush2.bf16.msra.mxu0 0
          %661 = vmatprep.subr.bf16.mxu0 0
          %662 = vmatpush2.bf16.msra.mxu0 0
          %663 = vmatprep.subr.bf16.mxu0 0
          %664 = vmatpush2.bf16.msra.mxu0 0
          %665 = vmatprep.mubr.bf16.mxu0 0
          %666 = vmatmul.mubr.bf16.gmra.mxu0 %v627
          %v667 = vpop.f32.mrf.mxu0
          %v668 = vadd.f32 0.0, %v667
          %v669 = vpop.f32.mrf.mxu0
          %v670 = vpop.f32.mrf.mxu0
          %v671 = vpop.f32.mrf.mxu0
          %672 = vdwg.mxu0
          %v705 = vunpack.c.l.b16 %v592
          %v706 = vunpack.c.l.b16 %v593
          %v707 = vunpack.c.l.b16 %v594
          %v708 = vunpack.c.l.b16 %v595
          %v709 = vunpack.c.l.b16 %v596
          %v710 = vunpack.c.l.b16 %v597
          %v711 = vunpack.c.l.b16 %v598
          %v712 = vunpack.c.l.b16 %v599
          %v713 = vunpack.c.l.b16 %v600
          %v714 = vunpack.c.l.b16 %v601
          %v715 = vunpack.c.l.b16 %v602
          %v716 = vunpack.c.l.b16 %v603
          %v717 = vunpack.c.l.b16 %v604
          %v718 = vunpack.c.l.b16 %v605
          %v719 = vunpack.c.l.b16 %v606
          %v720 = vunpack.c.l.b16 %v607
          %v721 = vunpack.c.l.b16 %v608
          %v722 = vunpack.c.l.b16 %v609
          %v723 = vunpack.c.l.b16 %v610
          %v724 = vunpack.c.l.b16 %v611
          %v725 = vunpack.c.l.b16 %v612
          %v726 = vunpack.c.l.b16 %v613
          %v727 = vunpack.c.l.b16 %v614
          %v728 = vunpack.c.l.b16 %v615
          %v729 = vunpack.c.l.b16 %v616
          %v730 = vunpack.c.l.b16 %v617
          %v731 = vunpack.c.l.b16 %v618
          %v732 = vunpack.c.l.b16 %v619
          %v733 = vunpack.c.l.b16 %v620
          %v734 = vunpack.c.l.b16 %v621
          %v735 = vunpack.c.l.b16 %v622
          %v736 = vunpack.c.l.b16 %v623
          %v737 = vpack.c.b16 %v706, %v705
          %v738 = vpack.c.b16 %v708, %v707
          %v739 = vpack.c.b16 %v710, %v709
          %v740 = vpack.c.b16 %v712, %v711
          %v741 = vpack.c.b16 %v714, %v713
          %v742 = vpack.c.b16 %v716, %v715
          %v743 = vpack.c.b16 %v718, %v717
          %v744 = vpack.c.b16 %v720, %v719
          %v745 = vpack.c.b16 %v722, %v721
          %v746 = vpack.c.b16 %v724, %v723
          %v747 = vpack.c.b16 %v726, %v725
          %v748 = vpack.c.b16 %v728, %v727
          %v749 = vpack.c.b16 %v730, %v729
          %v750 = vpack.c.b16 %v732, %v731
          %v751 = vpack.c.b16 %v734, %v733
          %v752 = vpack.c.b16 %v736, %v735
          %769 = vmatprep.subr.bf16.mxu0 0
          %770 = vmatpush1.bf16.msra.mxu0 %v744
          %771 = vmatprep.subr.bf16.mxu0 0
          %772 = vmatpush1.bf16.msra.mxu0 %v743
          %773 = vmatprep.subr.bf16.mxu0 0
          %774 = vmatpush1.bf16.msra.mxu0 %v742
          %775 = vmatprep.subr.bf16.mxu0 0
          %776 = vmatpush1.bf16.msra.mxu0 %v741
          %777 = vmatprep.subr.bf16.mxu0 0
          %778 = vmatpush1.bf16.msra.mxu0 %v740
          %779 = vmatprep.subr.bf16.mxu0 0
          %780 = vmatpush1.bf16.msra.mxu0 %v739
          %781 = vmatprep.subr.bf16.mxu0 0
          %782 = vmatpush1.bf16.msra.mxu0 %v738
          %783 = vmatprep.subr.bf16.mxu0 0
          %784 = vmatpush1.bf16.msra.mxu0 %v737
          %785 = vmatprep.subr.bf16.mxu0 0
          %786 = vmatpush2.bf16.msra.mxu0 %v752
          %787 = vmatprep.subr.bf16.mxu0 0
          %788 = vmatpush2.bf16.msra.mxu0 %v751
          %789 = vmatprep.subr.bf16.mxu0 0
          %790 = vmatpush2.bf16.msra.mxu0 %v750
          %791 = vmatprep.subr.bf16.mxu0 0
          %792 = vmatpush2.bf16.msra.mxu0 %v749
          %793 = vmatprep.subr.bf16.mxu0 0
          %794 = vmatpush2.bf16.msra.mxu0 %v748
          %795 = vmatprep.subr.bf16.mxu0 0
          %796 = vmatpush2.bf16.msra.mxu0 %v747
          %797 = vmatprep.subr.bf16.mxu0 0
          %798 = vmatpush2.bf16.msra.mxu0 %v746
          %799 = vmatprep.subr.bf16.mxu0 0
          %800 = vmatpush2.bf16.msra.mxu0 %v745
          %801 = vmatprep.mubr.bf16.mxu0 %v591
          %802 = vmatmul.mubr.bf16.gmra.mxu0 %v590
          %v803 = vpop.f32.mrf.mxu0
          %v804 = vadd.f32 %v668, %v803
          %v805 = vpop.f32.mrf.mxu0
          %v806 = vpop.f32.mrf.mxu0
          %v807 = vpop.f32.mrf.mxu0
          %808 = vdwg.mxu0
          %v809 = vld [vmem:[%s6] sm:$0x1]
          %v810 = vlaneseq
          %v811 = vshrl.u32 %v810, 7
          %v812 = vsub.s32 0, %v811
          %v813 = vrot.slane %v809, %v812
          %v814 = vadd.f32 %v804, %v813
          %v815 = vmax.f32 %v814, 0.0
          %v816 = vld [vmem:[%s6 + $0x1] sm:$0x1]
          %v817 = vlaneseq
          %v818 = vshrl.u32 %v817, 7
          %v819 = vsub.s32 0, %v818
          %v820 = vrot.slane %v816, %v819
          %v821 = vmul.f32 %v815, %v820
          %822 = vadd.xlane.f32.xlu0 %v821
          %v823 = vpop.xlane.xlu0 %822
          %v824 = vld [vmem:[%s6 + $0x2] sm:$0x1]
          %v825 = vlaneseq
          %v826 = vshrl.u32 %v825, 7
          %v827 = vsub.s32 0, %v826
          %v828 = vrot.slane %v824, %v827
          %v829 = vadd.f32 %v823, %v828
          %830 = vst [vmem:[%s349] sm:$0xff] %v829
        $region80: #{critic_policy_forward.1} parent=47 // pred_fallthru
          _
        %p831 = scmp.lt.s32.totalorder %s26, 0
        %s832 = scalar_select %p831, %s26, 0
        %s833 = smul.addr %s832, 8
        %s834 = scalar_lea.vmem %s7, %s833
        // Predicated region
        $region81: #{critic_policy_forward.1} parent=47 // pred_check
          %p835 = pneg %p208
        $region82: #{critic_policy_forward.1} parent=47 // pred_check_branch
          %837 = sbr.rel (%p835) target = $region84
        $region83: #{critic_policy_forward.1} parent=47 // pred_region
          _
        $region84: #{critic_policy_forward.1} parent=47 // pred_fallthru
          _
        // Predicated region
        $region85: #{critic_policy_forward.1} parent=47 // pred_check
          %p838 = pneg %p208
        $region86: #{critic_policy_forward.1} parent=47 // pred_check_branch
          %840 = sbr.rel (%p838) target = $region88
        $region87: #{critic_policy_forward.1} parent=47 // pred_region
          %p841 = scmp.lt.s32.totalorder %s26, 0
          %s842 = scalar_select %p841, %s26, 0
          %s843 = smul.addr %s842, 8
          %s844 = scalar_lea.vmem %s7, %s843
        $region88: #{critic_policy_forward.1} parent=47 // pred_fallthru
          _
      $region48: #{critic_policy_forward.1} parent=5 // pred_fallthru
        _
      %p845 = scmp.le.s32.totalorder 2, %s16
      // Predicated region
      $region89: #{critic_policy_forward.1} parent=5 // pred_check
        %p846 = pneg %p845
      $region90: #{critic_policy_forward.1} parent=5 // pred_check_branch
        %848 = sbr.rel (%p846) target = $region92
      $region91: #{critic_policy_forward.1} parent=5 // pred_region
        %s849 = ssub.s32 %s16, 2
      $region92: #{critic_policy_forward.1} parent=5 // pred_fallthru
        _
    $region6: #{critic_policy_forward.1} parent=1 // loop_footer
      %s20 = sadd.s32 1, %s16
    $region7: #{critic_policy_forward.1} parent=1 // loop_footer_branch
      %15 = sbr.rel target = $region3
    $region8: #{critic_policy_forward.1} parent=1 // loop_exit
      _
    %850 = vsyncpa [#allocation4], 1
    %s851 = scalar_lea.sflag [#allocation4], 1
    %852 = vsyncpa %s851, 1
    %853 = vsyncpa [#allocation6], 1
    %854 = vsyncpa [#allocation9], 1

</llo_original>
